<compile_context>
chip_gen: v5e
topology: v5e:2x2
jax: 0.10.0
libtpu: 0.0.40
codegen_flags: <defaults>
</compile_context>

<pallas_src>
import jax
import jax.numpy as jnp
from jax.experimental import pallas as pl
from jax.experimental.pallas import tpu as pltpu


def _conv1x1_kernel(x_ref, w_ref, b_ref, o_ref):
    # x_ref: (tm, C_in) f32; w_ref: (C_in, tn) f32/bf16 in the native (K, N)
    # MXU layout; b_ref: (1, tn) f32; o_ref: (tm, tn) f32.
    x = x_ref[...].astype(jnp.float32)
    w = w_ref[...].astype(jnp.float32)          # no-op for f32 weights
    acc = jnp.dot(x, w, preferred_element_type=jnp.float32)
    o_ref[...] = (acc + b_ref[...].astype(jnp.float32)).astype(o_ref.dtype)


def prepare_conv1x1_params(weight, bias, weight_dtype=None):
    """One-time, load-time parameter prep (NOT in the per-call path).

    weight: (C_out, C_in, 1, 1) PyTorch Conv2d layout.
    bias:   (C_out,)
    Returns (w_kn, bias2d) with w_kn in the MXU-native (C_in, C_out) layout,
    optionally cast to `weight_dtype` (e.g. bf16 to halve the weight DMA).
    """
    C_out, C_in = weight.shape[0], weight.shape[1]
    w_kn = jnp.asarray(weight).reshape(C_out, C_in).T        # (C_in, C_out)
    if weight_dtype is not None:
        w_kn = w_kn.astype(weight_dtype)
    bias2d = jnp.asarray(bias).reshape(1, C_out).astype(jnp.float32)
    return w_kn, bias2d


def _is_multi_tensorcore_chip():
    # v7x has 2 TensorCores per chip (per-TC HBM paths); v5e/v6e have 1.
    # TODO(synk): switch to pltpu.get_tpu_info() TC count once its field names
    # are stable; device_kind sniffing is conservative (defaults to 1 TC).
    try:
        kind = jax.devices()[0].device_kind.lower()
    except Exception:
        return False
    return ("v7" in kind) or ("tpu7" in kind) or ("7x" in kind)


def conv2d_1x1(x_nchw, w_kn, bias2d, *, tm=256):
    """1x1 conv, stride 1, no padding.

    x_nchw: (N, C_in, H, W) f32
    w_kn:   (C_in, C_out) from prepare_conv1x1_params (f32 or bf16)
    bias2d: (1, C_out) f32
    returns (N, C_out, H, W) f32
    """
    N, C_in, H, W = x_nchw.shape
    K, C_out = w_kn.shape
    assert K == C_in
    M = N * H * W

    # Flatten batch/spatial to matmul rows (free for H = W = 1).
    x2d = jnp.transpose(x_nchw, (0, 2, 3, 1)).reshape(M, C_in)

    # Row tiling only when M is large enough to matter (M = 1 -> single step).
    if M > tm:
        tm_eff, grid_m = tm, pl.cdiv(M, tm)
    else:
        tm_eff, grid_m = M, 1

    # v7x: split C_out across the 2 TensorCores to split the weight DMA;
    # single step elsewhere (extra grid step is pure overhead on 1-TC chips).
    n_split = 2 if (_is_multi_tensorcore_chip() and C_out % 256 == 0) else 1
    tn = C_out // n_split

    nbytes = lambda a: int(a.size) * a.dtype.itemsize
    cost = pl.CostEstimate(
        flops=2 * M * C_in * C_out,
        transcendentals=0,
        bytes_accessed=int(nbytes(x2d) + nbytes(w_kn) + nbytes(bias2d)
                           + M * C_out * x2d.dtype.itemsize),
    )

    out2d = pl.pallas_call(
        _conv1x1_kernel,
        out_shape=jax.ShapeDtypeStruct((M, C_out), x2d.dtype),
        grid=(grid_m, n_split),
        in_specs=[
            pl.BlockSpec((tm_eff, C_in), lambda i, j: (i, 0)),
            pl.BlockSpec((C_in, tn), lambda i, j: (0, j)),
            pl.BlockSpec((1, tn), lambda i, j: (0, j)),
        ],
        out_specs=pl.BlockSpec((tm_eff, tn), lambda i, j: (i, j)),
        compiler_params=pltpu.CompilerParams(
            dimension_semantics=("parallel", "parallel")),
        cost_estimate=cost,
    )(x2d, w_kn, bias2d)

    # Back to NCHW (free for H = W = 1).
    return jnp.transpose(out2d.reshape(N, H, W, C_out), (0, 3, 1, 2))


if __name__ == "__main__":
    key = jax.random.PRNGKey(0)
    k_x, k_w, k_b = jax.random.split(key, 3)

    C_in, C_out = 128, 3072
    # Deterministic synthetic parameters (shapes from Conv2d(128, 3072, 1)).
    weight = jax.random.normal(k_w, (C_out, C_in, 1, 1), dtype=jnp.float32) * 0.02
    bias = jax.random.normal(k_b, (C_out,), dtype=jnp.float32) * 0.01

    # Input matching the module's forward: [1, 128, 1, 1] (NCHW).
    x = jax.random.normal(k_x, (1, C_in, 1, 1), dtype=jnp.float32)

    # --- f32 weights: exact module semantics --------------------------------
    w_kn, b2d = prepare_conv1x1_params(weight, bias)
    out = jax.block_until_ready(conv2d_1x1(x, w_kn, b2d))
    ref = (x.reshape(1, C_in) @ weight.reshape(C_out, C_in).T + bias).reshape(
        1, C_out, 1, 1)
    assert out.shape == (1, C_out, 1, 1)
    assert jnp.allclose(out, ref, atol=1e-4, rtol=1e-4)

    # --- bf16 weight storage: halves the dominant HBM weight read -----------
    w_kn_bf, b2d_bf = prepare_conv1x1_params(weight, bias,
                                             weight_dtype=jnp.bfloat16)
    out_bf = jax.block_until_ready(conv2d_1x1(x, w_kn_bf, b2d_bf))
    ref_bf = (x.reshape(1, C_in) @ w_kn_bf.astype(jnp.float32) + bias).reshape(
        1, C_out, 1, 1)
    assert out_bf.shape == (1, C_out, 1, 1)
    assert jnp.allclose(out_bf, ref_bf, atol=2e-3, rtol=2e-3)

    print("KERNEL_OK")
</pallas_src>

<mosaic_0001>
module attributes {stable_mosaic.version = 11 : i64} {
  func.func @_conv1x1_kernel(%arg0: i32, %arg1: i32, %arg2: memref<1x128xf32, #tpu.memory_space<vmem>>, %arg3: memref<128x3072xf32, #tpu.memory_space<vmem>>, %arg4: memref<1x3072xf32, #tpu.memory_space<vmem>>, %arg5: memref<1x3072xf32, #tpu.memory_space<vmem>>) attributes {dimension_semantics = [#tpu.dimension_semantics<parallel>, #tpu.dimension_semantics<parallel>], iteration_bounds = array<i64: 1, 1>, scalar_prefetch = 0 : i64, scratch_operands = 0 : i64, tpu.core_type = #tpu.core_type<tc>, window_params = [{transform_indices = @transform_0, window_bounds = array<i64: 1, 128>}, {transform_indices = @transform_1, window_bounds = array<i64: 128, 3072>}, {transform_indices = @transform_2, window_bounds = array<i64: 1, 3072>}, {transform_indices = @transform_3, window_bounds = array<i64: 1, 3072>}]} {
    %c0 = arith.constant 0 : index
    %c0_0 = arith.constant 0 : index
    %0 = vector.load %arg2[%c0, %c0_0] : memref<1x128xf32, #tpu.memory_space<vmem>>, vector<1x128xf32>
    %c0_1 = arith.constant 0 : index
    %c0_2 = arith.constant 0 : index
    %1 = vector.load %arg3[%c0_1, %c0_2] : memref<128x3072xf32, #tpu.memory_space<vmem>>, vector<128x3072xf32>
    %cst = arith.constant dense<0.000000e+00> : vector<1x3072xf32>
    %2 = tpu.matmul %0, %1, %cst {dimension_numbers = #tpu.dot_dimension_numbers<[1], [0], [0], [1], [0, 0, 1, 1], [], []>} : vector<1x128xf32>, vector<128x3072xf32>, vector<1x3072xf32> -> vector<1x3072xf32>
    %c0_3 = arith.constant 0 : index
    %c0_4 = arith.constant 0 : index
    %3 = vector.load %arg4[%c0_3, %c0_4] : memref<1x3072xf32, #tpu.memory_space<vmem>>, vector<1x3072xf32>
    %4 = arith.addf %2, %3 : vector<1x3072xf32>
    %c0_5 = arith.constant 0 : index
    %c0_6 = arith.constant 0 : index
    %5 = vector.load %arg5[%c0_5, %c0_6] : memref<1x3072xf32, #tpu.memory_space<vmem>>, vector<1x3072xf32>
    tpu.vector_store %arg5[%c0_5, %c0_6], %4 {strides = array<i32>} : memref<1x3072xf32, #tpu.memory_space<vmem>>, vector<1x3072xf32>,
    return
  }
  func.func @transform_0(%arg0: i32, %arg1: i32) -> (i32, i32) {
    %c0_i32 = arith.constant 0 : i32
    %c0_i32_0 = arith.constant 0 : i32
    return %arg0, %c0_i32 : i32, i32
  }
  func.func @transform_1(%arg0: i32, %arg1: i32) -> (i32, i32) {
    %c0_i32 = arith.constant 0 : i32
    %c0_i32_0 = arith.constant 0 : i32
    return %c0_i32, %arg1 : i32, i32
  }
  func.func @transform_2(%arg0: i32, %arg1: i32) -> (i32, i32) {
    %c0_i32 = arith.constant 0 : i32
    %c0_i32_0 = arith.constant 0 : i32
    return %c0_i32, %arg1 : i32, i32
  }
  func.func @transform_3(%arg0: i32, %arg1: i32) -> (i32, i32) {
    %c0_i32 = arith.constant 0 : i32
    return %arg0, %arg1 : i32, i32
  }
}

</mosaic_0001>

<llo_original>
// kernel: tpu_custom_call.1
$region0: #{tpu_custom_call.1}
  #allocation0 [shape = 'u32[]', space=smem, size = 0x4, offset = 0x4, fixed_abs, tag = 'smem constant byte address 0x4 - core index']
  #allocation1 [shape = 'u32[72,128]{1,0:T(1,128)}', space=vmem, size = 0x9000, scoped, tag = 'internal scratch']
  %s0 = inlined_call_operand.hbm [shape: f32[1,128], index: 0, kind: input, shape index: {}]
  %s1 = inlined_call_operand.hbm [shape: f32[128,3072], index: 1, kind: input, shape index: {}]
  %s2 = inlined_call_operand.hbm [shape: f32[1,3072], index: 2, kind: input, shape index: {}]
  %s3 = inlined_call_operand.hbm [shape: f32[1,3072], index: 3, kind: output, shape index: {}]
  %s4 = sld [smem:[#allocation0]]
  $region34: #{tpu_custom_call.1} parent=0
    _
  %s6 = ssub.s32 1, %s4
  %s7 = scalar_select 0, %s6, %s4
  $region1: #{tpu_custom_call.1} parent=0
    #allocation2 [shape = 'u8[512]{0}', space=vmem, size = 0x400, scoped, tag = 'input window, operand 0, single buffered']
    #allocation3 [shape = 's32[1]{0}', space=sflag, size = 0x4, scoped, tag = 'scoped memory for tpu_custom_call.1']
    #allocation4 [shape = 's32[1]{0}', space=sflag, size = 0x4, scoped, tag = 'scoped memory for tpu_custom_call.1']
    #allocation5 [shape = 'u8[1572864]{0}', space=vmem, size = 0x180000, scoped, tag = 'input window, operand 1, single buffered']
    #allocation6 [shape = 's32[1]{0}', space=sflag, size = 0x4, scoped, tag = 'scoped memory for tpu_custom_call.1']
    #allocation7 [shape = 'u8[12288]{0}', space=vmem, size = 0x3000, scoped, tag = 'input window, operand 2, single buffered']
    #allocation8 [shape = 'u8[12288]{0}', space=vmem, size = 0x3000, scoped, tag = 'output window, operand 0, single buffered']
    %8 = vsyncpa [#allocation3], 0
    %9 = vsyncpa [#allocation6], 0
    %10 = vsyncpa [#allocation4], 0
    // Predicated region
    $region2: #{tpu_custom_call.1} parent=1 // pred_check
      _
    $region3: #{tpu_custom_call.1} parent=1 // pred_check_branch
      %12 = sbr.rel (0) target = $region5
    $region4: #{tpu_custom_call.1} parent=1 // pred_region
      %14 = vsyncadd [#allocation3], 0
      %s16 = sshll.u32 %s0, 4
      %s17 = int_to_ptr.hbm [resolvable:$true] %s16
      %s18 = sshll.u32 [#allocation2], 4
      %s19 = int_to_ptr.vmem [resolvable:$true] %s18
      %21 = dma.hbm_to_vmem [thread:$0]  %s17, 16, %s19, [#allocation3]
    $region5: #{tpu_custom_call.1} parent=1 // pred_fallthru
      _
    // Predicated region
    $region6: #{tpu_custom_call.1} parent=1 // pred_check
      _
    $region7: #{tpu_custom_call.1} parent=1 // pred_check_branch
      %23 = sbr.rel (0) target = $region9
    $region8: #{tpu_custom_call.1} parent=1 // pred_region
      %25 = vsyncadd [#allocation6], 0
      %s26 = sshll.u32 %s1, 4
      %s27 = int_to_ptr.hbm [resolvable:$true] %s26
      %s28 = sshll.u32 [#allocation5], 4
      %s29 = int_to_ptr.vmem [resolvable:$true] %s28
      %34 = dma.hbm_to_vmem [thread:$0]  %s27, 49152, %s29, [#allocation6], 3072, 3072, 192
    $region9: #{tpu_custom_call.1} parent=1 // pred_fallthru
      _
    // Predicated region
    $region10: #{tpu_custom_call.1} parent=1 // pred_check
      _
    $region11: #{tpu_custom_call.1} parent=1 // pred_check_branch
      %36 = sbr.rel (0) target = $region13
    $region12: #{tpu_custom_call.1} parent=1 // pred_region
      %38 = vsyncadd [#allocation6], 0
      %s40 = sshll.u32 %s2, 4
      %s41 = int_to_ptr.hbm [resolvable:$true] %s40
      %s42 = sshll.u32 [#allocation7], 4
      %s43 = int_to_ptr.vmem [resolvable:$true] %s42
      %45 = dma.hbm_to_vmem [thread:$0]  %s41, 384, %s43, [#allocation6]
    $region13: #{tpu_custom_call.1} parent=1 // pred_fallthru
      _
    // Predicated region
    $region14: #{tpu_custom_call.1} parent=1 // pred_check
      _
    $region15: #{tpu_custom_call.1} parent=1 // pred_check_branch
      %47 = sbr.rel (0) target = $region17
    $region16: #{tpu_custom_call.1} parent=1 // pred_region
      %49 = dma.done [#allocation3], 16
    $region17: #{tpu_custom_call.1} parent=1 // pred_fallthru
      _
    // Predicated region
    $region18: #{tpu_custom_call.1} parent=1 // pred_check
      _
    $region19: #{tpu_custom_call.1} parent=1 // pred_check_branch
      %51 = sbr.rel (0) target = $region21
    $region20: #{tpu_custom_call.1} parent=1 // pred_region
      %53 = dma.done [#allocation6], 49152
    $region21: #{tpu_custom_call.1} parent=1 // pred_fallthru
      _
    // Predicated region
    $region22: #{tpu_custom_call.1} parent=1 // pred_check
      _
    $region23: #{tpu_custom_call.1} parent=1 // pred_check_branch
      %55 = sbr.rel (0) target = $region25
    $region24: #{tpu_custom_call.1} parent=1 // pred_region
      %57 = dma.done [#allocation6], 384
    $region25: #{tpu_custom_call.1} parent=1 // pred_fallthru
      _
    %v58 = vld [vmem:[#allocation2] sm:$0x1]
    %v59 = vld [vmem:[#allocation5] sm:$0xff]
    %v60 = vld [vmem:[#allocation5 + $0x8] sm:$0xff]
    %v61 = vld [vmem:[#allocation5 + $0x10] sm:$0xff]
    %v62 = vld [vmem:[#allocation5 + $0x18] sm:$0xff]
    %v63 = vld [vmem:[#allocation5 + $0x20] sm:$0xff]
    %v64 = vld [vmem:[#allocation5 + $0x28] sm:$0xff]
    %v65 = vld [vmem:[#allocation5 + $0x30] sm:$0xff]
    %v66 = vld [vmem:[#allocation5 + $0x38] sm:$0xff]
    %v67 = vld [vmem:[#allocation5 + $0x40] sm:$0xff]
    %v68 = vld [vmem:[#allocation5 + $0x48] sm:$0xff]
    %v69 = vld [vmem:[#allocation5 + $0x50] sm:$0xff]
    %v70 = vld [vmem:[#allocation5 + $0x58] sm:$0xff]
    %v71 = vld [vmem:[#allocation5 + $0x60] sm:$0xff]
    %v72 = vld [vmem:[#allocation5 + $0x68] sm:$0xff]
    %v73 = vld [vmem:[#allocation5 + $0x70] sm:$0xff]
    %v74 = vld [vmem:[#allocation5 + $0x78] sm:$0xff]
    %v75 = vld [vmem:[#allocation5 + $0x80] sm:$0xff]
    %v76 = vld [vmem:[#allocation5 + $0x88] sm:$0xff]
    %v77 = vld [vmem:[#allocation5 + $0x90] sm:$0xff]
    %v78 = vld [vmem:[#allocation5 + $0x98] sm:$0xff]
    %v79 = vld [vmem:[#allocation5 + $0xa0] sm:$0xff]
    %v80 = vld [vmem:[#allocation5 + $0xa8] sm:$0xff]
    %v81 = vld [vmem:[#allocation5 + $0xb0] sm:$0xff]
    %v82 = vld [vmem:[#allocation5 + $0xb8] sm:$0xff]
    %v83 = vld [vmem:[#allocation5 + $0xc0] sm:$0xff]
    %v84 = vld [vmem:[#allocation5 + $0xc8] sm:$0xff]
    %v85 = vld [vmem:[#allocation5 + $0xd0] sm:$0xff]
    %v86 = vld [vmem:[#allocation5 + $0xd8] sm:$0xff]
    %v87 = vld [vmem:[#allocation5 + $0xe0] sm:$0xff]
    %v88 = vld [vmem:[#allocation5 + $0xe8] sm:$0xff]
    %v89 = vld [vmem:[#allocation5 + $0xf0] sm:$0xff]
    %v90 = vld [vmem:[#allocation5 + $0xf8] sm:$0xff]
    %v91 = vld [vmem:[#allocation5 + $0x100] sm:$0xff]
    %v92 = vld [vmem:[#allocation5 + $0x108] sm:$0xff]
    %v93 = vld [vmem:[#allocation5 + $0x110] sm:$0xff]
    %v94 = vld [vmem:[#allocation5 + $0x118] sm:$0xff]
    %v95 = vld [vmem:[#allocation5 + $0x120] sm:$0xff]
    %v96 = vld [vmem:[#allocation5 + $0x128] sm:$0xff]
    %v97 = vld [vmem:[#allocation5 + $0x130] sm:$0xff]
    %v98 = vld [vmem:[#allocation5 + $0x138] sm:$0xff]
    %v99 = vld [vmem:[#allocation5 + $0x140] sm:$0xff]
    %v100 = vld [vmem:[#allocation5 + $0x148] sm:$0xff]
    %v101 = vld [vmem:[#allocation5 + $0x150] sm:$0xff]
    %v102 = vld [vmem:[#allocation5 + $0x158] sm:$0xff]
    %v103 = vld [vmem:[#allocation5 + $0x160] sm:$0xff]
    %v104 = vld [vmem:[#allocation5 + $0x168] sm:$0xff]
    %v105 = vld [vmem:[#allocation5 + $0x170] sm:$0xff]
    %v106 = vld [vmem:[#allocation5 + $0x178] sm:$0xff]
    %v107 = vld [vmem:[#allocation5 + $0x180] sm:$0xff]
    %v108 = vld [vmem:[#allocation5 + $0x188] sm:$0xff]
    %v109 = vld [vmem:[#allocation5 + $0x190] sm:$0xff]
    %v110 = vld [vmem:[#allocation5 + $0x198] sm:$0xff]
    %v111 = vld [vmem:[#allocation5 + $0x1a0] sm:$0xff]
    %v112 = vld [vmem:[#allocation5 + $0x1a8] sm:$0xff]
    %v113 = vld [vmem:[#allocation5 + $0x1b0] sm:$0xff]
    %v114 = vld [vmem:[#allocation5 + $0x1b8] sm:$0xff]
    %v115 = vld [vmem:[#allocation5 + $0x1c0] sm:$0xff]
    %v116 = vld [vmem:[#allocation5 + $0x1c8] sm:$0xff]
    %v117 = vld [vmem:[#allocation5 + $0x1d0] sm:$0xff]
    %v118 = vld [vmem:[#allocation5 + $0x1d8] sm:$0xff]
    %v119 = vld [vmem:[#allocation5 + $0x1e0] sm:$0xff]
    %v120 = vld [vmem:[#allocation5 + $0x1e8] sm:$0xff]
    %v121 = vld [vmem:[#allocation5 + $0x1f0] sm:$0xff]
    %v122 = vld [vmem:[#allocation5 + $0x1f8] sm:$0xff]
    %v123 = vld [vmem:[#allocation5 + $0x200] sm:$0xff]
    %v124 = vld [vmem:[#allocation5 + $0x208] sm:$0xff]
    %v125 = vld [vmem:[#allocation5 + $0x210] sm:$0xff]
    %v126 = vld [vmem:[#allocation5 + $0x218] sm:$0xff]
    %v127 = vld [vmem:[#allocation5 + $0x220] sm:$0xff]
    %v128 = vld [vmem:[#allocation5 + $0x228] sm:$0xff]
    %v129 = vld [vmem:[#allocation5 + $0x230] sm:$0xff]
    %v130 = vld [vmem:[#allocation5 + $0x238] sm:$0xff]
    %v131 = vld [vmem:[#allocation5 + $0x240] sm:$0xff]
    %v132 = vld [vmem:[#allocation5 + $0x248] sm:$0xff]
    %v133 = vld [vmem:[#allocation5 + $0x250] sm:$0xff]
    %v134 = vld [vmem:[#allocation5 + $0x258] sm:$0xff]
    %v135 = vld [vmem:[#allocation5 + $0x260] sm:$0xff]
    %v136 = vld [vmem:[#allocation5 + $0x268] sm:$0xff]
    %v137 = vld [vmem:[#allocation5 + $0x270] sm:$0xff]
    %v138 = vld [vmem:[#allocation5 + $0x278] sm:$0xff]
    %v139 = vld [vmem:[#allocation5 + $0x280] sm:$0xff]
    %v140 = vld [vmem:[#allocation5 + $0x288] sm:$0xff]
    %v141 = vld [vmem:[#allocation5 + $0x290] sm:$0xff]
    %v142 = vld [vmem:[#allocation5 + $0x298] sm:$0xff]
    %v143 = vld [vmem:[#allocation5 + $0x2a0] sm:$0xff]
    %v144 = vld [vmem:[#allocation5 + $0x2a8] sm:$0xff]
    %v145 = vld [vmem:[#allocation5 + $0x2b0] sm:$0xff]
    %v146 = vld [vmem:[#allocation5 + $0x2b8] sm:$0xff]
    %v147 = vld [vmem:[#allocation5 + $0x2c0] sm:$0xff]
    %v148 = vld [vmem:[#allocation5 + $0x2c8] sm:$0xff]
    %v149 = vld [vmem:[#allocation5 + $0x2d0] sm:$0xff]
    %v150 = vld [vmem:[#allocation5 + $0x2d8] sm:$0xff]
    %v151 = vld [vmem:[#allocation5 + $0x2e0] sm:$0xff]
    %v152 = vld [vmem:[#allocation5 + $0x2e8] sm:$0xff]
    %v153 = vld [vmem:[#allocation5 + $0x2f0] sm:$0xff]
    %v154 = vld [vmem:[#allocation5 + $0x2f8] sm:$0xff]
    %v155 = vld [vmem:[#allocation5 + $0x300] sm:$0xff]
    %v156 = vld [vmem:[#allocation5 + $0x308] sm:$0xff]
    %v157 = vld [vmem:[#allocation5 + $0x310] sm:$0xff]
    %v158 = vld [vmem:[#allocation5 + $0x318] sm:$0xff]
    %v159 = vld [vmem:[#allocation5 + $0x320] sm:$0xff]
    %v160 = vld [vmem:[#allocation5 + $0x328] sm:$0xff]
    %v161 = vld [vmem:[#allocation5 + $0x330] sm:$0xff]
    %v162 = vld [vmem:[#allocation5 + $0x338] sm:$0xff]
    %v163 = vld [vmem:[#allocation5 + $0x340] sm:$0xff]
    %v164 = vld [vmem:[#allocation5 + $0x348] sm:$0xff]
    %v165 = vld [vmem:[#allocation5 + $0x350] sm:$0xff]
    %v166 = vld [vmem:[#allocation5 + $0x358] sm:$0xff]
    %v167 = vld [vmem:[#allocation5 + $0x360] sm:$0xff]
    %v168 = vld [vmem:[#allocation5 + $0x368] sm:$0xff]
    %v169 = vld [vmem:[#allocation5 + $0x370] sm:$0xff]
    %v170 = vld [vmem:[#allocation5 + $0x378] sm:$0xff]
    %v171 = vld [vmem:[#allocation5 + $0x380] sm:$0xff]
    %v172 = vld [vmem:[#allocation5 + $0x388] sm:$0xff]
    %v173 = vld [vmem:[#allocation5 + $0x390] sm:$0xff]
    %v174 = vld [vmem:[#allocation5 + $0x398] sm:$0xff]
    %v175 = vld [vmem:[#allocation5 + $0x3a0] sm:$0xff]
    %v176 = vld [vmem:[#allocation5 + $0x3a8] sm:$0xff]
    %v177 = vld [vmem:[#allocation5 + $0x3b0] sm:$0xff]
    %v178 = vld [vmem:[#allocation5 + $0x3b8] sm:$0xff]
    %v179 = vld [vmem:[#allocation5 + $0x3c0] sm:$0xff]
    %v180 = vld [vmem:[#allocation5 + $0x3c8] sm:$0xff]
    %v181 = vld [vmem:[#allocation5 + $0x3d0] sm:$0xff]
    %v182 = vld [vmem:[#allocation5 + $0x3d8] sm:$0xff]
    %v183 = vld [vmem:[#allocation5 + $0x3e0] sm:$0xff]
    %v184 = vld [vmem:[#allocation5 + $0x3e8] sm:$0xff]
    %v185 = vld [vmem:[#allocation5 + $0x3f0] sm:$0xff]
    %v186 = vld [vmem:[#allocation5 + $0x3f8] sm:$0xff]
    %v187 = vld [vmem:[#allocation5 + $0x400] sm:$0xff]
    %v188 = vld [vmem:[#allocation5 + $0x408] sm:$0xff]
    %v189 = vld [vmem:[#allocation5 + $0x410] sm:$0xff]
    %v190 = vld [vmem:[#allocation5 + $0x418] sm:$0xff]
    %v191 = vld [vmem:[#allocation5 + $0x420] sm:$0xff]
    %v192 = vld [vmem:[#allocation5 + $0x428] sm:$0xff]
    %v193 = vld [vmem:[#allocation5 + $0x430] sm:$0xff]
    %v194 = vld [vmem:[#allocation5 + $0x438] sm:$0xff]
    %v195 = vld [vmem:[#allocation5 + $0x440] sm:$0xff]
    %v196 = vld [vmem:[#allocation5 + $0x448] sm:$0xff]
    %v197 = vld [vmem:[#allocation5 + $0x450] sm:$0xff]
    %v198 = vld [vmem:[#allocation5 + $0x458] sm:$0xff]
    %v199 = vld [vmem:[#allocation5 + $0x460] sm:$0xff]
    %v200 = vld [vmem:[#allocation5 + $0x468] sm:$0xff]
    %v201 = vld [vmem:[#allocation5 + $0x470] sm:$0xff]
    %v202 = vld [vmem:[#allocation5 + $0x478] sm:$0xff]
    %v203 = vld [vmem:[#allocation5 + $0x480] sm:$0xff]
    %v204 = vld [vmem:[#allocation5 + $0x488] sm:$0xff]
    %v205 = vld [vmem:[#allocation5 + $0x490] sm:$0xff]
    %v206 = vld [vmem:[#allocation5 + $0x498] sm:$0xff]
    %v207 = vld [vmem:[#allocation5 + $0x4a0] sm:$0xff]
    %v208 = vld [vmem:[#allocation5 + $0x4a8] sm:$0xff]
    %v209 = vld [vmem:[#allocation5 + $0x4b0] sm:$0xff]
    %v210 = vld [vmem:[#allocation5 + $0x4b8] sm:$0xff]
    %v211 = vld [vmem:[#allocation5 + $0x4c0] sm:$0xff]
    %v212 = vld [vmem:[#allocation5 + $0x4c8] sm:$0xff]
    %v213 = vld [vmem:[#allocation5 + $0x4d0] sm:$0xff]
    %v214 = vld [vmem:[#allocation5 + $0x4d8] sm:$0xff]
    %v215 = vld [vmem:[#allocation5 + $0x4e0] sm:$0xff]
    %v216 = vld [vmem:[#allocation5 + $0x4e8] sm:$0xff]
    %v217 = vld [vmem:[#allocation5 + $0x4f0] sm:$0xff]
    %v218 = vld [vmem:[#allocation5 + $0x4f8] sm:$0xff]
    %v219 = vld [vmem:[#allocation5 + $0x500] sm:$0xff]
    %v220 = vld [vmem:[#allocation5 + $0x508] sm:$0xff]
    %v221 = vld [vmem:[#allocation5 + $0x510] sm:$0xff]
    %v222 = vld [vmem:[#allocation5 + $0x518] sm:$0xff]
    %v223 = vld [vmem:[#allocation5 + $0x520] sm:$0xff]
    %v224 = vld [vmem:[#allocation5 + $0x528] sm:$0xff]
    %v225 = vld [vmem:[#allocation5 + $0x530] sm:$0xff]
    %v226 = vld [vmem:[#allocation5 + $0x538] sm:$0xff]
    %v227 = vld [vmem:[#allocation5 + $0x540] sm:$0xff]
    %v228 = vld [vmem:[#allocation5 + $0x548] sm:$0xff]
    %v229 = vld [vmem:[#allocation5 + $0x550] sm:$0xff]
    %v230 = vld [vmem:[#allocation5 + $0x558] sm:$0xff]
    %v231 = vld [vmem:[#allocation5 + $0x560] sm:$0xff]
    %v232 = vld [vmem:[#allocation5 + $0x568] sm:$0xff]
    %v233 = vld [vmem:[#allocation5 + $0x570] sm:$0xff]
    %v234 = vld [vmem:[#allocation5 + $0x578] sm:$0xff]
    %v235 = vld [vmem:[#allocation5 + $0x580] sm:$0xff]
    %v236 = vld [vmem:[#allocation5 + $0x588] sm:$0xff]
    %v237 = vld [vmem:[#allocation5 + $0x590] sm:$0xff]
    %v238 = vld [vmem:[#allocation5 + $0x598] sm:$0xff]
    %v239 = vld [vmem:[#allocation5 + $0x5a0] sm:$0xff]
    %v240 = vld [vmem:[#allocation5 + $0x5a8] sm:$0xff]
    %v241 = vld [vmem:[#allocation5 + $0x5b0] sm:$0xff]
    %v242 = vld [vmem:[#allocation5 + $0x5b8] sm:$0xff]
    %v243 = vld [vmem:[#allocation5 + $0x5c0] sm:$0xff]
    %v244 = vld [vmem:[#allocation5 + $0x5c8] sm:$0xff]
    %v245 = vld [vmem:[#allocation5 + $0x5d0] sm:$0xff]
    %v246 = vld [vmem:[#allocation5 + $0x5d8] sm:$0xff]
    %v247 = vld [vmem:[#allocation5 + $0x5e0] sm:$0xff]
    %v248 = vld [vmem:[#allocation5 + $0x5e8] sm:$0xff]
    %v249 = vld [vmem:[#allocation5 + $0x5f0] sm:$0xff]
    %v250 = vld [vmem:[#allocation5 + $0x5f8] sm:$0xff]
    %v251 = vld [vmem:[#allocation5 + $0x600] sm:$0xff]
    %v252 = vld [vmem:[#allocation5 + $0x608] sm:$0xff]
    %v253 = vld [vmem:[#allocation5 + $0x610] sm:$0xff]
    %v254 = vld [vmem:[#allocation5 + $0x618] sm:$0xff]
    %v255 = vld [vmem:[#allocation5 + $0x620] sm:$0xff]
    %v256 = vld [vmem:[#allocation5 + $0x628] sm:$0xff]
    %v257 = vld [vmem:[#allocation5 + $0x630] sm:$0xff]
    %v258 = vld [vmem:[#allocation5 + $0x638] sm:$0xff]
    %v259 = vld [vmem:[#allocation5 + $0x640] sm:$0xff]
    %v260 = vld [vmem:[#allocation5 + $0x648] sm:$0xff]
    %v261 = vld [vmem:[#allocation5 + $0x650] sm:$0xff]
    %v262 = vld [vmem:[#allocation5 + $0x658] sm:$0xff]
    %v263 = vld [vmem:[#allocation5 + $0x660] sm:$0xff]
    %v264 = vld [vmem:[#allocation5 + $0x668] sm:$0xff]
    %v265 = vld [vmem:[#allocation5 + $0x670] sm:$0xff]
    %v266 = vld [vmem:[#allocation5 + $0x678] sm:$0xff]
    %v267 = vld [vmem:[#allocation5 + $0x680] sm:$0xff]
    %v268 = vld [vmem:[#allocation5 + $0x688] sm:$0xff]
    %v269 = vld [vmem:[#allocation5 + $0x690] sm:$0xff]
    %v270 = vld [vmem:[#allocation5 + $0x698] sm:$0xff]
    %v271 = vld [vmem:[#allocation5 + $0x6a0] sm:$0xff]
    %v272 = vld [vmem:[#allocation5 + $0x6a8] sm:$0xff]
    %v273 = vld [vmem:[#allocation5 + $0x6b0] sm:$0xff]
    %v274 = vld [vmem:[#allocation5 + $0x6b8] sm:$0xff]
    %v275 = vld [vmem:[#allocation5 + $0x6c0] sm:$0xff]
    %v276 = vld [vmem:[#allocation5 + $0x6c8] sm:$0xff]
    %v277 = vld [vmem:[#allocation5 + $0x6d0] sm:$0xff]
    %v278 = vld [vmem:[#allocation5 + $0x6d8] sm:$0xff]
    %v279 = vld [vmem:[#allocation5 + $0x6e0] sm:$0xff]
    %v280 = vld [vmem:[#allocation5 + $0x6e8] sm:$0xff]
    %v281 = vld [vmem:[#allocation5 + $0x6f0] sm:$0xff]
    %v282 = vld [vmem:[#allocation5 + $0x6f8] sm:$0xff]
    %v283 = vld [vmem:[#allocation5 + $0x700] sm:$0xff]
    %v284 = vld [vmem:[#allocation5 + $0x708] sm:$0xff]
    %v285 = vld [vmem:[#allocation5 + $0x710] sm:$0xff]
    %v286 = vld [vmem:[#allocation5 + $0x718] sm:$0xff]
    %v287 = vld [vmem:[#allocation5 + $0x720] sm:$0xff]
    %v288 = vld [vmem:[#allocation5 + $0x728] sm:$0xff]
    %v289 = vld [vmem:[#allocation5 + $0x730] sm:$0xff]
    %v290 = vld [vmem:[#allocation5 + $0x738] sm:$0xff]
    %v291 = vld [vmem:[#allocation5 + $0x740] sm:$0xff]
    %v292 = vld [vmem:[#allocation5 + $0x748] sm:$0xff]
    %v293 = vld [vmem:[#allocation5 + $0x750] sm:$0xff]
    %v294 = vld [vmem:[#allocation5 + $0x758] sm:$0xff]
    %v295 = vld [vmem:[#allocation5 + $0x760] sm:$0xff]
    %v296 = vld [vmem:[#allocation5 + $0x768] sm:$0xff]
    %v297 = vld [vmem:[#allocation5 + $0x770] sm:$0xff]
    %v298 = vld [vmem:[#allocation5 + $0x778] sm:$0xff]
    %v299 = vld [vmem:[#allocation5 + $0x780] sm:$0xff]
    %v300 = vld [vmem:[#allocation5 + $0x788] sm:$0xff]
    %v301 = vld [vmem:[#allocation5 + $0x790] sm:$0xff]
    %v302 = vld [vmem:[#allocation5 + $0x798] sm:$0xff]
    %v303 = vld [vmem:[#allocation5 + $0x7a0] sm:$0xff]
    %v304 = vld [vmem:[#allocation5 + $0x7a8] sm:$0xff]
    %v305 = vld [vmem:[#allocation5 + $0x7b0] sm:$0xff]
    %v306 = vld [vmem:[#allocation5 + $0x7b8] sm:$0xff]
    %v307 = vld [vmem:[#allocation5 + $0x7c0] sm:$0xff]
    %v308 = vld [vmem:[#allocation5 + $0x7c8] sm:$0xff]
    %v309 = vld [vmem:[#allocation5 + $0x7d0] sm:$0xff]
    %v310 = vld [vmem:[#allocation5 + $0x7d8] sm:$0xff]
    %v311 = vld [vmem:[#allocation5 + $0x7e0] sm:$0xff]
    %v312 = vld [vmem:[#allocation5 + $0x7e8] sm:$0xff]
    %v313 = vld [vmem:[#allocation5 + $0x7f0] sm:$0xff]
    %v314 = vld [vmem:[#allocation5 + $0x7f8] sm:$0xff]
    %v315 = vld [vmem:[#allocation5 + $0x800] sm:$0xff]
    %v316 = vld [vmem:[#allocation5 + $0x808] sm:$0xff]
    %v317 = vld [vmem:[#allocation5 + $0x810] sm:$0xff]
    %v318 = vld [vmem:[#allocation5 + $0x818] sm:$0xff]
    %v319 = vld [vmem:[#allocation5 + $0x820] sm:$0xff]
    %v320 = vld [vmem:[#allocation5 + $0x828] sm:$0xff]
    %v321 = vld [vmem:[#allocation5 + $0x830] sm:$0xff]
    %v322 = vld [vmem:[#allocation5 + $0x838] sm:$0xff]
    %v323 = vld [vmem:[#allocation5 + $0x840] sm:$0xff]
    %v324 = vld [vmem:[#allocation5 + $0x848] sm:$0xff]
    %v325 = vld [vmem:[#allocation5 + $0x850] sm:$0xff]
    %v326 = vld [vmem:[#allocation5 + $0x858] sm:$0xff]
    %v327 = vld [vmem:[#allocation5 + $0x860] sm:$0xff]
    %v328 = vld [vmem:[#allocation5 + $0x868] sm:$0xff]
    %v329 = vld [vmem:[#allocation5 + $0x870] sm:$0xff]
    %v330 = vld [vmem:[#allocation5 + $0x878] sm:$0xff]
    %v331 = vld [vmem:[#allocation5 + $0x880] sm:$0xff]
    %v332 = vld [vmem:[#allocation5 + $0x888] sm:$0xff]
    %v333 = vld [vmem:[#allocation5 + $0x890] sm:$0xff]
    %v334 = vld [vmem:[#allocation5 + $0x898] sm:$0xff]
    %v335 = vld [vmem:[#allocation5 + $0x8a0] sm:$0xff]
    %v336 = vld [vmem:[#allocation5 + $0x8a8] sm:$0xff]
    %v337 = vld [vmem:[#allocation5 + $0x8b0] sm:$0xff]
    %v338 = vld [vmem:[#allocation5 + $0x8b8] sm:$0xff]
    %v339 = vld [vmem:[#allocation5 + $0x8c0] sm:$0xff]
    %v340 = vld [vmem:[#allocation5 + $0x8c8] sm:$0xff]
    %v341 = vld [vmem:[#allocation5 + $0x8d0] sm:$0xff]
    %v342 = vld [vmem:[#allocation5 + $0x8d8] sm:$0xff]
    %v343 = vld [vmem:[#allocation5 + $0x8e0] sm:$0xff]
    %v344 = vld [vmem:[#allocation5 + $0x8e8] sm:$0xff]
    %v345 = vld [vmem:[#allocation5 + $0x8f0] sm:$0xff]
    %v346 = vld [vmem:[#allocation5 + $0x8f8] sm:$0xff]
    %v347 = vld [vmem:[#allocation5 + $0x900] sm:$0xff]
    %v348 = vld [vmem:[#allocation5 + $0x908] sm:$0xff]
    %v349 = vld [vmem:[#allocation5 + $0x910] sm:$0xff]
    %v350 = vld [vmem:[#allocation5 + $0x918] sm:$0xff]
    %v351 = vld [vmem:[#allocation5 + $0x920] sm:$0xff]
    %v352 = vld [vmem:[#allocation5 + $0x928] sm:$0xff]
    %v353 = vld [vmem:[#allocation5 + $0x930] sm:$0xff]
    %v354 = vld [vmem:[#allocation5 + $0x938] sm:$0xff]
    %v355 = vld [vmem:[#allocation5 + $0x940] sm:$0xff]
    %v356 = vld [vmem:[#allocation5 + $0x948] sm:$0xff]
    %v357 = vld [vmem:[#allocation5 + $0x950] sm:$0xff]
    %v358 = vld [vmem:[#allocation5 + $0x958] sm:$0xff]
    %v359 = vld [vmem:[#allocation5 + $0x960] sm:$0xff]
    %v360 = vld [vmem:[#allocation5 + $0x968] sm:$0xff]
    %v361 = vld [vmem:[#allocation5 + $0x970] sm:$0xff]
    %v362 = vld [vmem:[#allocation5 + $0x978] sm:$0xff]
    %v363 = vld [vmem:[#allocation5 + $0x980] sm:$0xff]
    %v364 = vld [vmem:[#allocation5 + $0x988] sm:$0xff]
    %v365 = vld [vmem:[#allocation5 + $0x990] sm:$0xff]
    %v366 = vld [vmem:[#allocation5 + $0x998] sm:$0xff]
    %v367 = vld [vmem:[#allocation5 + $0x9a0] sm:$0xff]
    %v368 = vld [vmem:[#allocation5 + $0x9a8] sm:$0xff]
    %v369 = vld [vmem:[#allocation5 + $0x9b0] sm:$0xff]
    %v370 = vld [vmem:[#allocation5 + $0x9b8] sm:$0xff]
    %v371 = vld [vmem:[#allocation5 + $0x9c0] sm:$0xff]
    %v372 = vld [vmem:[#allocation5 + $0x9c8] sm:$0xff]
    %v373 = vld [vmem:[#allocation5 + $0x9d0] sm:$0xff]
    %v374 = vld [vmem:[#allocation5 + $0x9d8] sm:$0xff]
    %v375 = vld [vmem:[#allocation5 + $0x9e0] sm:$0xff]
    %v376 = vld [vmem:[#allocation5 + $0x9e8] sm:$0xff]
    %v377 = vld [vmem:[#allocation5 + $0x9f0] sm:$0xff]
    %v378 = vld [vmem:[#allocation5 + $0x9f8] sm:$0xff]
    %v379 = vld [vmem:[#allocation5 + $0xa00] sm:$0xff]
    %v380 = vld [vmem:[#allocation5 + $0xa08] sm:$0xff]
    %v381 = vld [vmem:[#allocation5 + $0xa10] sm:$0xff]
    %v382 = vld [vmem:[#allocation5 + $0xa18] sm:$0xff]
    %v383 = vld [vmem:[#allocation5 + $0xa20] sm:$0xff]
    %v384 = vld [vmem:[#allocation5 + $0xa28] sm:$0xff]
    %v385 = vld [vmem:[#allocation5 + $0xa30] sm:$0xff]
    %v386 = vld [vmem:[#allocation5 + $0xa38] sm:$0xff]
    %v387 = vld [vmem:[#allocation5 + $0xa40] sm:$0xff]
    %v388 = vld [vmem:[#allocation5 + $0xa48] sm:$0xff]
    %v389 = vld [vmem:[#allocation5 + $0xa50] sm:$0xff]
    %v390 = vld [vmem:[#allocation5 + $0xa58] sm:$0xff]
    %v391 = vld [vmem:[#allocation5 + $0xa60] sm:$0xff]
    %v392 = vld [vmem:[#allocation5 + $0xa68] sm:$0xff]
    %v393 = vld [vmem:[#allocation5 + $0xa70] sm:$0xff]
    %v394 = vld [vmem:[#allocation5 + $0xa78] sm:$0xff]
    %v395 = vld [vmem:[#allocation5 + $0xa80] sm:$0xff]
    %v396 = vld [vmem:[#allocation5 + $0xa88] sm:$0xff]
    %v397 = vld [vmem:[#allocation5 + $0xa90] sm:$0xff]
    %v398 = vld [vmem:[#allocation5 + $0xa98] sm:$0xff]
    %v399 = vld [vmem:[#allocation5 + $0xaa0] sm:$0xff]
    %v400 = vld [vmem:[#allocation5 + $0xaa8] sm:$0xff]
    %v401 = vld [vmem:[#allocation5 + $0xab0] sm:$0xff]
    %v402 = vld [vmem:[#allocation5 + $0xab8] sm:$0xff]
    %v403 = vld [vmem:[#allocation5 + $0xac0] sm:$0xff]
    %v404 = vld [vmem:[#allocation5 + $0xac8] sm:$0xff]
    %v405 = vld [vmem:[#allocation5 + $0xad0] sm:$0xff]
    %v406 = vld [vmem:[#allocation5 + $0xad8] sm:$0xff]
    %v407 = vld [vmem:[#allocation5 + $0xae0] sm:$0xff]
    %v408 = vld [vmem:[#allocation5 + $0xae8] sm:$0xff]
    %v409 = vld [vmem:[#allocation5 + $0xaf0] sm:$0xff]
    %v410 = vld [vmem:[#allocation5 + $0xaf8] sm:$0xff]
    %v411 = vld [vmem:[#allocation5 + $0xb00] sm:$0xff]
    %v412 = vld [vmem:[#allocation5 + $0xb08] sm:$0xff]
    %v413 = vld [vmem:[#allocation5 + $0xb10] sm:$0xff]
    %v414 = vld [vmem:[#allocation5 + $0xb18] sm:$0xff]
    %v415 = vld [vmem:[#allocation5 + $0xb20] sm:$0xff]
    %v416 = vld [vmem:[#allocation5 + $0xb28] sm:$0xff]
    %v417 = vld [vmem:[#allocation5 + $0xb30] sm:$0xff]
    %v418 = vld [vmem:[#allocation5 + $0xb38] sm:$0xff]
    %v419 = vld [vmem:[#allocation5 + $0xb40] sm:$0xff]
    %v420 = vld [vmem:[#allocation5 + $0xb48] sm:$0xff]
    %v421 = vld [vmem:[#allocation5 + $0xb50] sm:$0xff]
    %v422 = vld [vmem:[#allocation5 + $0xb58] sm:$0xff]
    %v423 = vld [vmem:[#allocation5 + $0xb60] sm:$0xff]
    %v424 = vld [vmem:[#allocation5 + $0xb68] sm:$0xff]
    %v425 = vld [vmem:[#allocation5 + $0xb70] sm:$0xff]
    %v426 = vld [vmem:[#allocation5 + $0xb78] sm:$0xff]
    %v427 = vld [vmem:[#allocation5 + $0xb80] sm:$0xff]
    %v428 = vld [vmem:[#allocation5 + $0xb88] sm:$0xff]
    %v429 = vld [vmem:[#allocation5 + $0xb90] sm:$0xff]
    %v430 = vld [vmem:[#allocation5 + $0xb98] sm:$0xff]
    %v431 = vld [vmem:[#allocation5 + $0xba0] sm:$0xff]
    %v432 = vld [vmem:[#allocation5 + $0xba8] sm:$0xff]
    %v433 = vld [vmem:[#allocation5 + $0xbb0] sm:$0xff]
    %v434 = vld [vmem:[#allocation5 + $0xbb8] sm:$0xff]
    %v435 = vld [vmem:[#allocation5 + $0xbc0] sm:$0xff]
    %v436 = vld [vmem:[#allocation5 + $0xbc8] sm:$0xff]
    %v437 = vld [vmem:[#allocation5 + $0xbd0] sm:$0xff]
    %v438 = vld [vmem:[#allocation5 + $0xbd8] sm:$0xff]
    %v439 = vld [vmem:[#allocation5 + $0xbe0] sm:$0xff]
    %v440 = vld [vmem:[#allocation5 + $0xbe8] sm:$0xff]
    %v441 = vld [vmem:[#allocation5 + $0xbf0] sm:$0xff]
    %v442 = vld [vmem:[#allocation5 + $0xbf8] sm:$0xff]
    %v443 = vld [vmem:[#allocation7] sm:$0xff]
    %v444 = vld [vmem:[#allocation7 + $0x8] sm:$0xff]
    %v445 = vld [vmem:[#allocation7 + $0x10] sm:$0xff]
    %v449 = vperm.slane %v443, 0
    %v450 = vperm.slane %v443, 1
    %v451 = vperm.slane %v443, 2
    %v452 = vperm.slane %v443, 3
    %v453 = vperm.slane %v443, 4
    %v454 = vperm.slane %v443, 5
    %v455 = vperm.slane %v443, 6
    %v456 = vperm.slane %v443, 7
    %v457 = vperm.slane %v444, 0
    %v458 = vperm.slane %v444, 1
    %v459 = vperm.slane %v444, 2
    %v460 = vperm.slane %v444, 3
    %v461 = vperm.slane %v444, 4
    %v462 = vperm.slane %v444, 5
    %v463 = vperm.slane %v444, 6
    %v464 = vperm.slane %v444, 7
    %v465 = vperm.slane %v445, 0
    %v466 = vperm.slane %v445, 1
    %v467 = vperm.slane %v445, 2
    %v468 = vperm.slane %v445, 3
    %v469 = vperm.slane %v445, 4
    %v470 = vperm.slane %v445, 5
    %v471 = vperm.slane %v445, 6
    %v472 = vperm.slane %v445, 7
    %497 = vmatpush.msra.mxu0 %v419
    %498 = vmatpush.msra.mxu0 %v395
    %499 = vmatpush.msra.mxu0 %v371
    %500 = vmatpush.msra.mxu0 %v347
    %501 = vmatpush.msra.mxu0 %v323
    %502 = vmatpush.msra.mxu0 %v299
    %503 = vmatpush.msra.mxu0 %v275
    %504 = vmatpush.msra.mxu0 %v251
    %505 = vmatpush.msra.mxu0 %v227
    %506 = vmatpush.msra.mxu0 %v203
    %507 = vmatpush.msra.mxu0 %v179
    %508 = vmatpush.msra.mxu0 %v155
    %509 = vmatpush.msra.mxu0 %v131
    %510 = vmatpush.msra.mxu0 %v107
    %511 = vmatpush.msra.mxu0 %v83
    %512 = vmatpush.msra.mxu0 %v59
    %513 = vmatmul.f32.gmra.mxu0 %v58
    %v514 = vpop.f32.mrf.mxu0
    %v515 = vadd.f32 %v449, %v514
    %516 = vdwg.mxu0
    %517 = vmatpush.msra.mxu0 %v420
    %518 = vmatpush.msra.mxu0 %v396
    %519 = vmatpush.msra.mxu0 %v372
    %520 = vmatpush.msra.mxu0 %v348
    %521 = vmatpush.msra.mxu0 %v324
    %522 = vmatpush.msra.mxu0 %v300
    %523 = vmatpush.msra.mxu0 %v276
    %524 = vmatpush.msra.mxu0 %v252
    %525 = vmatpush.msra.mxu0 %v228
    %526 = vmatpush.msra.mxu0 %v204
    %527 = vmatpush.msra.mxu0 %v180
    %528 = vmatpush.msra.mxu0 %v156
    %529 = vmatpush.msra.mxu0 %v132
    %530 = vmatpush.msra.mxu0 %v108
    %531 = vmatpush.msra.mxu0 %v84
    %532 = vmatpush.msra.mxu0 %v60
    %533 = vmatmul.f32.gmra.mxu0 %v58
    %v534 = vpop.f32.mrf.mxu0
    %v535 = vadd.f32 %v450, %v534
    %536 = vdwg.mxu0
    %537 = vmatpush.msra.mxu0 %v421
    %538 = vmatpush.msra.mxu0 %v397
    %539 = vmatpush.msra.mxu0 %v373
    %540 = vmatpush.msra.mxu0 %v349
    %541 = vmatpush.msra.mxu0 %v325
    %542 = vmatpush.msra.mxu0 %v301
    %543 = vmatpush.msra.mxu0 %v277
    %544 = vmatpush.msra.mxu0 %v253
    %545 = vmatpush.msra.mxu0 %v229
    %546 = vmatpush.msra.mxu0 %v205
    %547 = vmatpush.msra.mxu0 %v181
    %548 = vmatpush.msra.mxu0 %v157
    %549 = vmatpush.msra.mxu0 %v133
    %550 = vmatpush.msra.mxu0 %v109
    %551 = vmatpush.msra.mxu0 %v85
    %552 = vmatpush.msra.mxu0 %v61
    %553 = vmatmul.f32.gmra.mxu0 %v58
    %v554 = vpop.f32.mrf.mxu0
    %v555 = vadd.f32 %v451, %v554
    %556 = vdwg.mxu0
    %557 = vmatpush.msra.mxu0 %v422
    %558 = vmatpush.msra.mxu0 %v398
    %559 = vmatpush.msra.mxu0 %v374
    %560 = vmatpush.msra.mxu0 %v350
    %561 = vmatpush.msra.mxu0 %v326
    %562 = vmatpush.msra.mxu0 %v302
    %563 = vmatpush.msra.mxu0 %v278
    %564 = vmatpush.msra.mxu0 %v254
    %565 = vmatpush.msra.mxu0 %v230
    %566 = vmatpush.msra.mxu0 %v206
    %567 = vmatpush.msra.mxu0 %v182
    %568 = vmatpush.msra.mxu0 %v158
    %569 = vmatpush.msra.mxu0 %v134
    %570 = vmatpush.msra.mxu0 %v110
    %571 = vmatpush.msra.mxu0 %v86
    %572 = vmatpush.msra.mxu0 %v62
    %573 = vmatmul.f32.gmra.mxu0 %v58
    %v574 = vpop.f32.mrf.mxu0
    %v575 = vadd.f32 %v452, %v574
    %576 = vdwg.mxu0
    %577 = vmatpush.msra.mxu0 %v423
    %578 = vmatpush.msra.mxu0 %v399
    %579 = vmatpush.msra.mxu0 %v375
    %580 = vmatpush.msra.mxu0 %v351
    %581 = vmatpush.msra.mxu0 %v327
    %582 = vmatpush.msra.mxu0 %v303
    %583 = vmatpush.msra.mxu0 %v279
    %584 = vmatpush.msra.mxu0 %v255
    %585 = vmatpush.msra.mxu0 %v231
    %586 = vmatpush.msra.mxu0 %v207
    %587 = vmatpush.msra.mxu0 %v183
    %588 = vmatpush.msra.mxu0 %v159
    %589 = vmatpush.msra.mxu0 %v135
    %590 = vmatpush.msra.mxu0 %v111
    %591 = vmatpush.msra.mxu0 %v87
    %592 = vmatpush.msra.mxu0 %v63
    %593 = vmatmul.f32.gmra.mxu0 %v58
    %v594 = vpop.f32.mrf.mxu0
    %v595 = vadd.f32 %v453, %v594
    %596 = vdwg.mxu0
    %597 = vmatpush.msra.mxu0 %v424
    %598 = vmatpush.msra.mxu0 %v400
    %599 = vmatpush.msra.mxu0 %v376
    %600 = vmatpush.msra.mxu0 %v352
    %601 = vmatpush.msra.mxu0 %v328
    %602 = vmatpush.msra.mxu0 %v304
    %603 = vmatpush.msra.mxu0 %v280
    %604 = vmatpush.msra.mxu0 %v256
    %605 = vmatpush.msra.mxu0 %v232
    %606 = vmatpush.msra.mxu0 %v208
    %607 = vmatpush.msra.mxu0 %v184
    %608 = vmatpush.msra.mxu0 %v160
    %609 = vmatpush.msra.mxu0 %v136
    %610 = vmatpush.msra.mxu0 %v112
    %611 = vmatpush.msra.mxu0 %v88
    %612 = vmatpush.msra.mxu0 %v64
    %613 = vmatmul.f32.gmra.mxu0 %v58
    %v614 = vpop.f32.mrf.mxu0
    %v615 = vadd.f32 %v454, %v614
    %616 = vdwg.mxu0
    %617 = vmatpush.msra.mxu0 %v425
    %618 = vmatpush.msra.mxu0 %v401
    %619 = vmatpush.msra.mxu0 %v377
    %620 = vmatpush.msra.mxu0 %v353
    %621 = vmatpush.msra.mxu0 %v329
    %622 = vmatpush.msra.mxu0 %v305
    %623 = vmatpush.msra.mxu0 %v281
    %624 = vmatpush.msra.mxu0 %v257
    %625 = vmatpush.msra.mxu0 %v233
    %626 = vmatpush.msra.mxu0 %v209
    %627 = vmatpush.msra.mxu0 %v185
    %628 = vmatpush.msra.mxu0 %v161
    %629 = vmatpush.msra.mxu0 %v137
    %630 = vmatpush.msra.mxu0 %v113
    %631 = vmatpush.msra.mxu0 %v89
    %632 = vmatpush.msra.mxu0 %v65
    %633 = vmatmul.f32.gmra.mxu0 %v58
    %v634 = vpop.f32.mrf.mxu0
    %v635 = vadd.f32 %v455, %v634
    %636 = vdwg.mxu0
    %637 = vmatpush.msra.mxu0 %v426
    %638 = vmatpush.msra.mxu0 %v402
    %639 = vmatpush.msra.mxu0 %v378
    %640 = vmatpush.msra.mxu0 %v354
    %641 = vmatpush.msra.mxu0 %v330
    %642 = vmatpush.msra.mxu0 %v306
    %643 = vmatpush.msra.mxu0 %v282
    %644 = vmatpush.msra.mxu0 %v258
    %645 = vmatpush.msra.mxu0 %v234
    %646 = vmatpush.msra.mxu0 %v210
    %647 = vmatpush.msra.mxu0 %v186
    %648 = vmatpush.msra.mxu0 %v162
    %649 = vmatpush.msra.mxu0 %v138
    %650 = vmatpush.msra.mxu0 %v114
    %651 = vmatpush.msra.mxu0 %v90
    %652 = vmatpush.msra.mxu0 %v66
    %653 = vmatmul.f32.gmra.mxu0 %v58
    %v654 = vpop.f32.mrf.mxu0
    %v655 = vadd.f32 %v456, %v654
    %656 = vdwg.mxu0
    %657 = vmatpush.msra.mxu0 %v427
    %658 = vmatpush.msra.mxu0 %v403
    %659 = vmatpush.msra.mxu0 %v379
    %660 = vmatpush.msra.mxu0 %v355
    %661 = vmatpush.msra.mxu0 %v331
    %662 = vmatpush.msra.mxu0 %v307
    %663 = vmatpush.msra.mxu0 %v283
    %664 = vmatpush.msra.mxu0 %v259
    %665 = vmatpush.msra.mxu0 %v235
    %666 = vmatpush.msra.mxu0 %v211
    %667 = vmatpush.msra.mxu0 %v187
    %668 = vmatpush.msra.mxu0 %v163
    %669 = vmatpush.msra.mxu0 %v139
    %670 = vmatpush.msra.mxu0 %v115
    %671 = vmatpush.msra.mxu0 %v91
    %672 = vmatpush.msra.mxu0 %v67
    %673 = vmatmul.f32.gmra.mxu0 %v58
    %v674 = vpop.f32.mrf.mxu0
    %v675 = vadd.f32 %v457, %v674
    %676 = vdwg.mxu0
    %677 = vmatpush.msra.mxu0 %v428
    %678 = vmatpush.msra.mxu0 %v404
    %679 = vmatpush.msra.mxu0 %v380
    %680 = vmatpush.msra.mxu0 %v356
    %681 = vmatpush.msra.mxu0 %v332
    %682 = vmatpush.msra.mxu0 %v308
    %683 = vmatpush.msra.mxu0 %v284
    %684 = vmatpush.msra.mxu0 %v260
    %685 = vmatpush.msra.mxu0 %v236
    %686 = vmatpush.msra.mxu0 %v212
    %687 = vmatpush.msra.mxu0 %v188
    %688 = vmatpush.msra.mxu0 %v164
    %689 = vmatpush.msra.mxu0 %v140
    %690 = vmatpush.msra.mxu0 %v116
    %691 = vmatpush.msra.mxu0 %v92
    %692 = vmatpush.msra.mxu0 %v68
    %693 = vmatmul.f32.gmra.mxu0 %v58
    %v694 = vpop.f32.mrf.mxu0
    %v695 = vadd.f32 %v458, %v694
    %696 = vdwg.mxu0
    %697 = vmatpush.msra.mxu0 %v429
    %698 = vmatpush.msra.mxu0 %v405
    %699 = vmatpush.msra.mxu0 %v381
    %700 = vmatpush.msra.mxu0 %v357
    %701 = vmatpush.msra.mxu0 %v333
    %702 = vmatpush.msra.mxu0 %v309
    %703 = vmatpush.msra.mxu0 %v285
    %704 = vmatpush.msra.mxu0 %v261
    %705 = vmatpush.msra.mxu0 %v237
    %706 = vmatpush.msra.mxu0 %v213
    %707 = vmatpush.msra.mxu0 %v189
    %708 = vmatpush.msra.mxu0 %v165
    %709 = vmatpush.msra.mxu0 %v141
    %710 = vmatpush.msra.mxu0 %v117
    %711 = vmatpush.msra.mxu0 %v93
    %712 = vmatpush.msra.mxu0 %v69
    %713 = vmatmul.f32.gmra.mxu0 %v58
    %v714 = vpop.f32.mrf.mxu0
    %v715 = vadd.f32 %v459, %v714
    %716 = vdwg.mxu0
    %717 = vmatpush.msra.mxu0 %v430
    %718 = vmatpush.msra.mxu0 %v406
    %719 = vmatpush.msra.mxu0 %v382
    %720 = vmatpush.msra.mxu0 %v358
    %721 = vmatpush.msra.mxu0 %v334
    %722 = vmatpush.msra.mxu0 %v310
    %723 = vmatpush.msra.mxu0 %v286
    %724 = vmatpush.msra.mxu0 %v262
    %725 = vmatpush.msra.mxu0 %v238
    %726 = vmatpush.msra.mxu0 %v214
    %727 = vmatpush.msra.mxu0 %v190
    %728 = vmatpush.msra.mxu0 %v166
    %729 = vmatpush.msra.mxu0 %v142
    %730 = vmatpush.msra.mxu0 %v118
    %731 = vmatpush.msra.mxu0 %v94
    %732 = vmatpush.msra.mxu0 %v70
    %733 = vmatmul.f32.gmra.mxu0 %v58
    %v734 = vpop.f32.mrf.mxu0
    %v735 = vadd.f32 %v460, %v734
    %736 = vdwg.mxu0
    %737 = vmatpush.msra.mxu0 %v431
    %738 = vmatpush.msra.mxu0 %v407
    %739 = vmatpush.msra.mxu0 %v383
    %740 = vmatpush.msra.mxu0 %v359
    %741 = vmatpush.msra.mxu0 %v335
    %742 = vmatpush.msra.mxu0 %v311
    %743 = vmatpush.msra.mxu0 %v287
    %744 = vmatpush.msra.mxu0 %v263
    %745 = vmatpush.msra.mxu0 %v239
    %746 = vmatpush.msra.mxu0 %v215
    %747 = vmatpush.msra.mxu0 %v191
    %748 = vmatpush.msra.mxu0 %v167
    %749 = vmatpush.msra.mxu0 %v143
    %750 = vmatpush.msra.mxu0 %v119
    %751 = vmatpush.msra.mxu0 %v95
    %752 = vmatpush.msra.mxu0 %v71
    %753 = vmatmul.f32.gmra.mxu0 %v58
    %v754 = vpop.f32.mrf.mxu0
    %v755 = vadd.f32 %v461, %v754
    %756 = vdwg.mxu0
    %757 = vmatpush.msra.mxu0 %v432
    %758 = vmatpush.msra.mxu0 %v408
    %759 = vmatpush.msra.mxu0 %v384
    %760 = vmatpush.msra.mxu0 %v360
    %761 = vmatpush.msra.mxu0 %v336
    %762 = vmatpush.msra.mxu0 %v312
    %763 = vmatpush.msra.mxu0 %v288
    %764 = vmatpush.msra.mxu0 %v264
    %765 = vmatpush.msra.mxu0 %v240
    %766 = vmatpush.msra.mxu0 %v216
    %767 = vmatpush.msra.mxu0 %v192
    %768 = vmatpush.msra.mxu0 %v168
    %769 = vmatpush.msra.mxu0 %v144
    %770 = vmatpush.msra.mxu0 %v120
    %771 = vmatpush.msra.mxu0 %v96
    %772 = vmatpush.msra.mxu0 %v72
    %773 = vmatmul.f32.gmra.mxu0 %v58
    %v774 = vpop.f32.mrf.mxu0
    %v775 = vadd.f32 %v462, %v774
    %776 = vdwg.mxu0
    %777 = vmatpush.msra.mxu0 %v433
    %778 = vmatpush.msra.mxu0 %v409
    %779 = vmatpush.msra.mxu0 %v385
    %780 = vmatpush.msra.mxu0 %v361
    %781 = vmatpush.msra.mxu0 %v337
    %782 = vmatpush.msra.mxu0 %v313
    %783 = vmatpush.msra.mxu0 %v289
    %784 = vmatpush.msra.mxu0 %v265
    %785 = vmatpush.msra.mxu0 %v241
    %786 = vmatpush.msra.mxu0 %v217
    %787 = vmatpush.msra.mxu0 %v193
    %788 = vmatpush.msra.mxu0 %v169
    %789 = vmatpush.msra.mxu0 %v145
    %790 = vmatpush.msra.mxu0 %v121
    %791 = vmatpush.msra.mxu0 %v97
    %792 = vmatpush.msra.mxu0 %v73
    %793 = vmatmul.f32.gmra.mxu0 %v58
    %v794 = vpop.f32.mrf.mxu0
    %v795 = vadd.f32 %v463, %v794
    %796 = vdwg.mxu0
    %797 = vmatpush.msra.mxu0 %v434
    %798 = vmatpush.msra.mxu0 %v410
    %799 = vmatpush.msra.mxu0 %v386
    %800 = vmatpush.msra.mxu0 %v362
    %801 = vmatpush.msra.mxu0 %v338
    %802 = vmatpush.msra.mxu0 %v314
    %803 = vmatpush.msra.mxu0 %v290
    %804 = vmatpush.msra.mxu0 %v266
    %805 = vmatpush.msra.mxu0 %v242
    %806 = vmatpush.msra.mxu0 %v218
    %807 = vmatpush.msra.mxu0 %v194
    %808 = vmatpush.msra.mxu0 %v170
    %809 = vmatpush.msra.mxu0 %v146
    %810 = vmatpush.msra.mxu0 %v122
    %811 = vmatpush.msra.mxu0 %v98
    %812 = vmatpush.msra.mxu0 %v74
    %813 = vmatmul.f32.gmra.mxu0 %v58
    %v814 = vpop.f32.mrf.mxu0
    %v815 = vadd.f32 %v464, %v814
    %816 = vdwg.mxu0
    %817 = vmatpush.msra.mxu0 %v435
    %818 = vmatpush.msra.mxu0 %v411
    %819 = vmatpush.msra.mxu0 %v387
    %820 = vmatpush.msra.mxu0 %v363
    %821 = vmatpush.msra.mxu0 %v339
    %822 = vmatpush.msra.mxu0 %v315
    %823 = vmatpush.msra.mxu0 %v291
    %824 = vmatpush.msra.mxu0 %v267
    %825 = vmatpush.msra.mxu0 %v243
    %826 = vmatpush.msra.mxu0 %v219
    %827 = vmatpush.msra.mxu0 %v195
    %828 = vmatpush.msra.mxu0 %v171
    %829 = vmatpush.msra.mxu0 %v147
    %830 = vmatpush.msra.mxu0 %v123
    %831 = vmatpush.msra.mxu0 %v99
    %832 = vmatpush.msra.mxu0 %v75
    %833 = vmatmul.f32.gmra.mxu0 %v58
    %v834 = vpop.f32.mrf.mxu0
    %v835 = vadd.f32 %v465, %v834
    %836 = vdwg.mxu0
    %837 = vmatpush.msra.mxu0 %v436
    %838 = vmatpush.msra.mxu0 %v412
    %839 = vmatpush.msra.mxu0 %v388
    %840 = vmatpush.msra.mxu0 %v364
    %841 = vmatpush.msra.mxu0 %v340
    %842 = vmatpush.msra.mxu0 %v316
    %843 = vmatpush.msra.mxu0 %v292
    %844 = vmatpush.msra.mxu0 %v268
    %845 = vmatpush.msra.mxu0 %v244
    %846 = vmatpush.msra.mxu0 %v220
    %847 = vmatpush.msra.mxu0 %v196
    %848 = vmatpush.msra.mxu0 %v172
    %849 = vmatpush.msra.mxu0 %v148
    %850 = vmatpush.msra.mxu0 %v124
    %851 = vmatpush.msra.mxu0 %v100
    %852 = vmatpush.msra.mxu0 %v76
    %853 = vmatmul.f32.gmra.mxu0 %v58
    %v854 = vpop.f32.mrf.mxu0
    %v855 = vadd.f32 %v466, %v854
    %856 = vdwg.mxu0
    %857 = vmatpush.msra.mxu0 %v437
    %858 = vmatpush.msra.mxu0 %v413
    %859 = vmatpush.msra.mxu0 %v389
    %860 = vmatpush.msra.mxu0 %v365
    %861 = vmatpush.msra.mxu0 %v341
    %862 = vmatpush.msra.mxu0 %v317
    %863 = vmatpush.msra.mxu0 %v293
    %864 = vmatpush.msra.mxu0 %v269
    %865 = vmatpush.msra.mxu0 %v245
    %866 = vmatpush.msra.mxu0 %v221
    %867 = vmatpush.msra.mxu0 %v197
    %868 = vmatpush.msra.mxu0 %v173
    %869 = vmatpush.msra.mxu0 %v149
    %870 = vmatpush.msra.mxu0 %v125
    %871 = vmatpush.msra.mxu0 %v101
    %872 = vmatpush.msra.mxu0 %v77
    %873 = vmatmul.f32.gmra.mxu0 %v58
    %v874 = vpop.f32.mrf.mxu0
    %v875 = vadd.f32 %v467, %v874
    %876 = vdwg.mxu0
    %877 = vmatpush.msra.mxu0 %v438
    %878 = vmatpush.msra.mxu0 %v414
    %879 = vmatpush.msra.mxu0 %v390
    %880 = vmatpush.msra.mxu0 %v366
    %881 = vmatpush.msra.mxu0 %v342
    %882 = vmatpush.msra.mxu0 %v318
    %883 = vmatpush.msra.mxu0 %v294
    %884 = vmatpush.msra.mxu0 %v270
    %885 = vmatpush.msra.mxu0 %v246
    %886 = vmatpush.msra.mxu0 %v222
    %887 = vmatpush.msra.mxu0 %v198
    %888 = vmatpush.msra.mxu0 %v174
    %889 = vmatpush.msra.mxu0 %v150
    %890 = vmatpush.msra.mxu0 %v126
    %891 = vmatpush.msra.mxu0 %v102
    %892 = vmatpush.msra.mxu0 %v78
    %893 = vmatmul.f32.gmra.mxu0 %v58
    %v894 = vpop.f32.mrf.mxu0
    %v895 = vadd.f32 %v468, %v894
    %896 = vdwg.mxu0
    %897 = vmatpush.msra.mxu0 %v439
    %898 = vmatpush.msra.mxu0 %v415
    %899 = vmatpush.msra.mxu0 %v391
    %900 = vmatpush.msra.mxu0 %v367
    %901 = vmatpush.msra.mxu0 %v343
    %902 = vmatpush.msra.mxu0 %v319
    %903 = vmatpush.msra.mxu0 %v295
    %904 = vmatpush.msra.mxu0 %v271
    %905 = vmatpush.msra.mxu0 %v247
    %906 = vmatpush.msra.mxu0 %v223
    %907 = vmatpush.msra.mxu0 %v199
    %908 = vmatpush.msra.mxu0 %v175
    %909 = vmatpush.msra.mxu0 %v151
    %910 = vmatpush.msra.mxu0 %v127
    %911 = vmatpush.msra.mxu0 %v103
    %912 = vmatpush.msra.mxu0 %v79
    %913 = vmatmul.f32.gmra.mxu0 %v58
    %v914 = vpop.f32.mrf.mxu0
    %v915 = vadd.f32 %v469, %v914
    %916 = vdwg.mxu0
    %917 = vmatpush.msra.mxu0 %v440
    %918 = vmatpush.msra.mxu0 %v416
    %919 = vmatpush.msra.mxu0 %v392
    %920 = vmatpush.msra.mxu0 %v368
    %921 = vmatpush.msra.mxu0 %v344
    %922 = vmatpush.msra.mxu0 %v320
    %923 = vmatpush.msra.mxu0 %v296
    %924 = vmatpush.msra.mxu0 %v272
    %925 = vmatpush.msra.mxu0 %v248
    %926 = vmatpush.msra.mxu0 %v224
    %927 = vmatpush.msra.mxu0 %v200
    %928 = vmatpush.msra.mxu0 %v176
    %929 = vmatpush.msra.mxu0 %v152
    %930 = vmatpush.msra.mxu0 %v128
    %931 = vmatpush.msra.mxu0 %v104
    %932 = vmatpush.msra.mxu0 %v80
    %933 = vmatmul.f32.gmra.mxu0 %v58
    %v934 = vpop.f32.mrf.mxu0
    %v935 = vadd.f32 %v470, %v934
    %936 = vdwg.mxu0
    %937 = vmatpush.msra.mxu0 %v441
    %938 = vmatpush.msra.mxu0 %v417
    %939 = vmatpush.msra.mxu0 %v393
    %940 = vmatpush.msra.mxu0 %v369
    %941 = vmatpush.msra.mxu0 %v345
    %942 = vmatpush.msra.mxu0 %v321
    %943 = vmatpush.msra.mxu0 %v297
    %944 = vmatpush.msra.mxu0 %v273
    %945 = vmatpush.msra.mxu0 %v249
    %946 = vmatpush.msra.mxu0 %v225
    %947 = vmatpush.msra.mxu0 %v201
    %948 = vmatpush.msra.mxu0 %v177
    %949 = vmatpush.msra.mxu0 %v153
    %950 = vmatpush.msra.mxu0 %v129
    %951 = vmatpush.msra.mxu0 %v105
    %952 = vmatpush.msra.mxu0 %v81
    %953 = vmatmul.f32.gmra.mxu0 %v58
    %v954 = vpop.f32.mrf.mxu0
    %v955 = vadd.f32 %v471, %v954
    %956 = vdwg.mxu0
    %957 = vmatpush.msra.mxu0 %v442
    %958 = vmatpush.msra.mxu0 %v418
    %959 = vmatpush.msra.mxu0 %v394
    %960 = vmatpush.msra.mxu0 %v370
    %961 = vmatpush.msra.mxu0 %v346
    %962 = vmatpush.msra.mxu0 %v322
    %963 = vmatpush.msra.mxu0 %v298
    %964 = vmatpush.msra.mxu0 %v274
    %965 = vmatpush.msra.mxu0 %v250
    %966 = vmatpush.msra.mxu0 %v226
    %967 = vmatpush.msra.mxu0 %v202
    %968 = vmatpush.msra.mxu0 %v178
    %969 = vmatpush.msra.mxu0 %v154
    %970 = vmatpush.msra.mxu0 %v130
    %971 = vmatpush.msra.mxu0 %v106
    %972 = vmatpush.msra.mxu0 %v82
    %973 = vmatmul.f32.gmra.mxu0 %v58
    %v974 = vpop.f32.mrf.mxu0
    %v975 = vadd.f32 %v472, %v974
    %976 = vdwg.mxu0
    %v1001 = vrot.slane %v535, 7
    %v1002 = vrot.slane %v555, 6
    %v1003 = vrot.slane %v575, 5
    %v1004 = vrot.slane %v595, 4
    %v1005 = vrot.slane %v615, 3
    %v1006 = vrot.slane %v635, 2
    %v1007 = vrot.slane %v655, 1
    %v1008 = vrot.slane %v695, 7
    %v1009 = vrot.slane %v715, 6
    %v1010 = vrot.slane %v735, 5
    %v1011 = vrot.slane %v755, 4
    %v1012 = vrot.slane %v775, 3
    %v1013 = vrot.slane %v795, 2
    %v1014 = vrot.slane %v815, 1
    %v1015 = vrot.slane %v855, 7
    %v1016 = vrot.slane %v875, 6
    %v1017 = vrot.slane %v895, 5
    %v1018 = vrot.slane %v915, 4
    %v1019 = vrot.slane %v935, 3
    %v1020 = vrot.slane %v955, 2
    %v1021 = vrot.slane %v975, 1
    %vm1022 = vcmask 1040384
    %v1023 = vsel %vm1022, %v515, %v1001
    %vm1024 = vcmask 1042434
    %v1025 = vsel %vm1024, %v1002, %v1003
    %vm1026 = vcmask 1041408
    %v1027 = vsel %vm1026, %v1023, %v1025
    %vm1028 = vcmask 1044484
    %v1029 = vsel %vm1028, %v1004, %v1005
    %vm1030 = vcmask 1046534
    %v1031 = vsel %vm1030, %v1006, %v1007
    %vm1032 = vcmask 1045508
    %v1033 = vsel %vm1032, %v1029, %v1031
    %vm1034 = vcmask 1043456
    %v1035 = vsel %vm1034, %v1027, %v1033
    %v1036 = vsel %vm1022, %v675, %v1008
    %v1037 = vsel %vm1024, %v1009, %v1010
    %v1038 = vsel %vm1026, %v1036, %v1037
    %v1039 = vsel %vm1028, %v1011, %v1012
    %v1040 = vsel %vm1030, %v1013, %v1014
    %v1041 = vsel %vm1032, %v1039, %v1040
    %v1042 = vsel %vm1034, %v1038, %v1041
    %v1043 = vsel %vm1022, %v835, %v1015
    %v1044 = vsel %vm1024, %v1016, %v1017
    %v1045 = vsel %vm1026, %v1043, %v1044
    %v1046 = vsel %vm1028, %v1018, %v1019
    %v1047 = vsel %vm1030, %v1020, %v1021
    %v1048 = vsel %vm1032, %v1046, %v1047
    %v1049 = vsel %vm1034, %v1045, %v1048
    %1053 = vst [vmem:[#allocation8] sm:$0xff] %v1035
    %1054 = vst [vmem:[#allocation8 + $0x8] sm:$0xff] %v1042
    %1055 = vst [vmem:[#allocation8 + $0x10] sm:$0xff] %v1049
    // Predicated region
    $region26: #{tpu_custom_call.1} parent=1 // pred_check
      _
    $region27: #{tpu_custom_call.1} parent=1 // pred_check_branch
      %1057 = sbr.rel (0) target = $region29
    $region28: #{tpu_custom_call.1} parent=1 // pred_region
      %1059 = vsyncadd [#allocation4], 0
      %s1061 = sshll.u32 [#allocation8], 4
      %s1062 = int_to_ptr.vmem [resolvable:$true] %s1061
      %s1063 = sshll.u32 %s3, 4
      %s1064 = int_to_ptr.hbm [resolvable:$true] %s1063
      %1066 = dma.vmem_to_hbm [thread:$0]  %s1062, 384, %s1064, [#allocation4]
    $region29: #{tpu_custom_call.1} parent=1 // pred_fallthru
      _
    // Predicated region
    $region30: #{tpu_custom_call.1} parent=1 // pred_check
      _
    $region31: #{tpu_custom_call.1} parent=1 // pred_check_branch
      %1068 = sbr.rel (0) target = $region33
    $region32: #{tpu_custom_call.1} parent=1 // pred_region
      %1070 = dma.done [#allocation4], 384
    $region33: #{tpu_custom_call.1} parent=1 // pred_fallthru
      _
    %1071 = vsyncpa [#allocation3], 1
    %1072 = vsyncpa [#allocation6], 1
    %1073 = vsyncpa [#allocation4], 1

</llo_original>
